<compile_context>
chip_gen: v6e
topology: v6e:2x2x1
jax: 0.10.0
libtpu: 0.0.40
codegen_flags: <defaults>
</compile_context>

<pallas_src>
import jax
import jax.numpy as jnp
from jax.experimental import pallas as pl
from jax.experimental.pallas import tpu as pltpu

CLASSES = 18
EPSILON = 1e-7


def _f1_loss_kernel(pred_ref, label_ref, out_ref):
    logits = pred_ref[...].astype(jnp.float32)   # (N, C) — upcast in-kernel
    labels = label_ref[...]                      # (N, 1) int32
    n, c = logits.shape

    # Numerically stable softmax over the class (lane) axis.
    m = jnp.max(logits, axis=1, keepdims=True)                 # (N, 1)
    e = jnp.exp(logits - m)                                    # (N, C)
    denom = jnp.sum(e, axis=1, keepdims=True)                  # (N, 1)
    # approx reciprocal (EUP) + one Newton-Raphson step: ~2^-24 rel. error.
    inv = pl.reciprocal(denom, approx=True)
    inv = inv * (2.0 - denom * inv)
    y_pred = e * inv                                           # (N, C) softmax

    # one_hot mask via select (no materialized f32 one-hot, no extra vmul).
    class_ids = jax.lax.broadcasted_iota(jnp.int32, (n, c), 1)
    mask = class_ids == labels                                 # (N, C) bool

    # Per-class batch reductions, kept as (1, C) lane-aligned slabs.
    tp = jnp.sum(jnp.where(mask, y_pred, 0.0), axis=0, keepdims=True)   # (1, C)
    pred_sum = jnp.sum(y_pred, axis=0, keepdims=True)                   # (1, C)
    true_cnt = jnp.sum(jnp.where(mask, 1.0, 0.0), axis=0, keepdims=True)

    # Algebraic soft-F1: 2*tp + fp + fn == pred_sum + true_cnt, so
    # f1 = 2*tp / (pred_sum + true_cnt + eps)  (single divide).
    f1 = 2.0 * tp / (pred_sum + true_cnt + EPSILON)
    f1 = jnp.clip(f1, EPSILON, 1.0 - EPSILON)

    # Scalar store to SMEM output.
    out_ref[0, 0] = 1.0 - jnp.sum(f1) / c


def f1_loss(y_pred: jax.Array, y_true: jax.Array) -> jax.Array:
    """Pallas TPU implementation of F1Loss.forward.

    y_pred: (N, C) float logits (f32 or bf16)
    y_true: (N,)   integer class labels in [0, C)
    returns: scalar float32 loss
    """
    assert y_pred.ndim == 2
    assert y_true.ndim == 1
    n, c = y_pred.shape
    assert c == CLASSES

    labels_2d = y_true.astype(jnp.int32).reshape(n, 1)

    cost = pl.CostEstimate(
        flops=10 * n * c,                      # softmax + reductions + f1 math
        transcendentals=n * c,                 # exp (+ vrcp)
        bytes_accessed=n * c * y_pred.dtype.itemsize + n * 4 + 4,
    )

    out = pl.pallas_call(
        _f1_loss_kernel,
        out_shape=jax.ShapeDtypeStruct((1, 1), jnp.float32),
        in_specs=[
            pl.BlockSpec(memory_space=pltpu.MemorySpace.VMEM),   # whole (N, C)
            pl.BlockSpec(memory_space=pltpu.MemorySpace.VMEM),   # whole (N, 1)
        ],
        out_specs=pl.BlockSpec(memory_space=pltpu.MemorySpace.SMEM),
        cost_estimate=cost,
    )(y_pred, labels_2d)
    return out[0, 0]


def f1_loss_ref(y_pred, y_true):
    """Pure-JAX reference matching the PyTorch module."""
    y_true_oh = jax.nn.one_hot(y_true, CLASSES, dtype=jnp.float32)
    p = jax.nn.softmax(y_pred.astype(jnp.float32), axis=1)
    tp = jnp.sum(y_true_oh * p, axis=0)
    fp = jnp.sum((1.0 - y_true_oh) * p, axis=0)
    fn = jnp.sum(y_true_oh * (1.0 - p), axis=0)
    precision = tp / (tp + fp + EPSILON)
    recall = tp / (tp + fn + EPSILON)
    f1 = 2.0 * (precision * recall) / (precision + recall + EPSILON)
    f1 = jnp.clip(f1, EPSILON, 1.0 - EPSILON)
    return 1.0 - jnp.mean(f1)


if __name__ == "__main__":
    key = jax.random.PRNGKey(0)
    k_pred, k_true = jax.random.split(key)

    N = 8  # batch size
    y_pred = jax.random.normal(k_pred, (N, CLASSES), dtype=jnp.float32)
    y_true = jax.random.randint(k_true, (N,), 0, CLASSES, dtype=jnp.int32)

    loss = f1_loss(y_pred, y_true)
    jax.block_until_ready(loss)

    ref = f1_loss_ref(y_pred, y_true)
    assert jnp.allclose(loss, ref, atol=1e-5, rtol=1e-5), (loss, ref)

    print("KERNEL_OK")
</pallas_src>

<mosaic_0001>
module attributes {stable_mosaic.version = 11 : i64} {
  func.func @_f1_loss_kernel(%arg0: memref<8x18xf32, #tpu.memory_space<vmem>>, %arg1: memref<8x1xi32, #tpu.memory_space<vmem>>, %arg2: memref<1x1xf32, #tpu.memory_space<smem>>) attributes {dimension_semantics = [], scalar_prefetch = 0 : i64, scratch_operands = 0 : i64, tpu.core_type = #tpu.core_type<tc>} {
    %c0 = arith.constant 0 : index
    %c0_0 = arith.constant 0 : index
    %0 = vector.load %arg0[%c0, %c0_0] : memref<8x18xf32, #tpu.memory_space<vmem>>, vector<8x18xf32>
    %c0_1 = arith.constant 0 : index
    %c0_2 = arith.constant 0 : index
    %1 = vector.load %arg1[%c0_1, %c0_2] : memref<8x1xi32, #tpu.memory_space<vmem>>, vector<8x1xi32>
    %cst = arith.constant dense<0xFF800000> : vector<8xf32>
    %2 = vector.multi_reduction <maximumf>, %0, %cst [1] : vector<8x18xf32> to vector<8xf32>
    %3 = vector.shape_cast %2 : vector<8xf32> to vector<8x1xf32>
    %4 = vector.broadcast %3 : vector<8x1xf32> to vector<8x18xf32>
    %5 = arith.subf %0, %4 : vector<8x18xf32>
    %6 = math.exp %5 : vector<8x18xf32>
    %cst_3 = arith.constant dense<0.000000e+00> : vector<8xf32>
    %7 = vector.multi_reduction <add>, %6, %cst_3 [1] : vector<8x18xf32> to vector<8xf32>
    %8 = vector.shape_cast %7 : vector<8xf32> to vector<8x1xf32>
    %9 = tpu.reciprocal %8 {approx = true} : vector<8x1xf32> -> vector<8x1xf32>
    %10 = arith.mulf %8, %9 : vector<8x1xf32>
    %cst_4 = arith.constant 2.000000e+00 : f32
    %11 = vector.broadcast %cst_4 : f32 to vector<8x1xf32>
    %12 = arith.subf %11, %10 : vector<8x1xf32>
    %13 = arith.mulf %9, %12 : vector<8x1xf32>
    %14 = vector.broadcast %13 : vector<8x1xf32> to vector<8x18xf32>
    %15 = arith.mulf %6, %14 : vector<8x18xf32>
    %16 = tpu.iota {dimensions = array<i32: 1>} : vector<8x18xi32>
    %17 = vector.broadcast %1 : vector<8x1xi32> to vector<8x18xi32>
    %18 = arith.cmpi eq, %16, %17 : vector<8x18xi32>
    %cst_5 = arith.constant 0.000000e+00 : f32
    %19 = vector.broadcast %cst_5 : f32 to vector<8x18xf32>
    %20 = arith.select %18, %15, %19 : vector<8x18xi1>, vector<8x18xf32>
    %cst_6 = arith.constant dense<0.000000e+00> : vector<18xf32>
    %21 = vector.multi_reduction <add>, %20, %cst_6 [0] : vector<8x18xf32> to vector<18xf32>
    %22 = vector.shape_cast %21 : vector<18xf32> to vector<1x18xf32>
    %cst_7 = arith.constant dense<0.000000e+00> : vector<18xf32>
    %23 = vector.multi_reduction <add>, %15, %cst_7 [0] : vector<8x18xf32> to vector<18xf32>
    %24 = vector.shape_cast %23 : vector<18xf32> to vector<1x18xf32>
    %cst_8 = arith.constant 1.000000e+00 : f32
    %cst_9 = arith.constant 0.000000e+00 : f32
    %25 = vector.broadcast %cst_8 : f32 to vector<8x18xf32>
    %26 = vector.broadcast %cst_9 : f32 to vector<8x18xf32>
    %27 = arith.select %18, %25, %26 : vector<8x18xi1>, vector<8x18xf32>
    %cst_10 = arith.constant dense<0.000000e+00> : vector<18xf32>
    %28 = vector.multi_reduction <add>, %27, %cst_10 [0] : vector<8x18xf32> to vector<18xf32>
    %29 = vector.shape_cast %28 : vector<18xf32> to vector<1x18xf32>
    %cst_11 = arith.constant 2.000000e+00 : f32
    %30 = vector.broadcast %cst_11 : f32 to vector<1x18xf32>
    %31 = arith.mulf %30, %22 : vector<1x18xf32>
    %32 = arith.addf %24, %29 : vector<1x18xf32>
    %cst_12 = arith.constant 1.000000e-07 : f32
    %33 = vector.broadcast %cst_12 : f32 to vector<1x18xf32>
    %34 = arith.addf %32, %33 : vector<1x18xf32>
    %35 = arith.divf %31, %34 : vector<1x18xf32>
    %cst_13 = arith.constant 1.000000e-07 : f32
    %cst_14 = arith.constant 0.99999988 : f32
    %36 = vector.broadcast %cst_13 : f32 to vector<1x18xf32>
    %37 = arith.maximumf %36, %35 : vector<1x18xf32>
    %38 = vector.broadcast %cst_14 : f32 to vector<1x18xf32>
    %39 = arith.minimumf %38, %37 : vector<1x18xf32>
    %40 = vector.shape_cast %39 : vector<1x18xf32> to vector<1x1x18xf32>
    %cst_15 = arith.constant dense<0.000000e+00> : vector<1xf32>
    %41 = vector.multi_reduction <add>, %40, %cst_15 [1, 2] : vector<1x1x18xf32> to vector<1xf32>
    %42 = vector.shape_cast %41 : vector<1xf32> to vector<1x1x1xf32>
    %43 = vector.extract %42[0, 0, 0] : f32 from vector<1x1x1xf32>
    %cst_16 = arith.constant 1.800000e+01 : f32
    %44 = arith.divf %43, %cst_16 : f32
    %cst_17 = arith.constant 1.000000e+00 : f32
    %45 = arith.subf %cst_17, %44 : f32
    %c0_18 = arith.constant 0 : index
    %c0_19 = arith.constant 0 : index
    %46 = memref.load %arg2[%c0_18, %c0_19] : memref<1x1xf32, #tpu.memory_space<smem>>
    memref.store %45, %arg2[%c0_18, %c0_19] : memref<1x1xf32, #tpu.memory_space<smem>>
    return
  }
}

</mosaic_0001>

<llo_original>
// kernel: tpu_custom_call.1
$region0: #{tpu_custom_call.1}
  #allocation0 [shape = 'u32[]', space=smem, size = 0x4, offset = 0x4, fixed_abs, tag = 'smem constant byte address 0x4 - core index']
  #allocation1 [shape = 'u32[144,128]{1,0:T(1,128)}', space=vmem, size = 0x12000, scoped, tag = 'internal scratch']
  %s0 = inlined_call_operand.vmem [shape: f32[8,18], index: 0, kind: input, shape index: {}]
  %s1 = inlined_call_operand.vmem [shape: s32[8,1], index: 1, kind: input, shape index: {}]
  %s2 = inlined_call_operand.hbm [shape: f32[1,1], index: 2, kind: output, shape index: {}]
  %s3 = sld [smem:[#allocation0]]
  $region18: #{tpu_custom_call.1} parent=0
    _
  %s5 = ssub.s32 1, %s3
  %s6 = scalar_select 0, %s5, %s3
  $region1: #{tpu_custom_call.1} parent=0
    #allocation2 [shape = 'u8[512]{0}', space=smem, size = 0x200, scoped, tag = 'output window, operand 0, single buffered']
    #allocation3 [shape = 's32[1]{0}', space=sflag, size = 0x4, scoped, tag = 'scoped memory for tpu_custom_call.1']
    %7 = vsyncpa [#allocation3], 0
    // Predicated region
    $region2: #{tpu_custom_call.1} parent=1 // pred_check
      _
    $region3: #{tpu_custom_call.1} parent=1 // pred_check_branch
      %9 = sbr.rel (0) target = $region5
    $region4: #{tpu_custom_call.1} parent=1 // pred_region
      _
    $region5: #{tpu_custom_call.1} parent=1 // pred_fallthru
      _
    // Predicated region
    $region6: #{tpu_custom_call.1} parent=1 // pred_check
      _
    $region7: #{tpu_custom_call.1} parent=1 // pred_check_branch
      %11 = sbr.rel (0) target = $region9
    $region8: #{tpu_custom_call.1} parent=1 // pred_region
      _
    $region9: #{tpu_custom_call.1} parent=1 // pred_fallthru
      _
    %v12 = vld [vmem:[%s0] sm:$0xff]
    %v13 = vld [vmem:[%s1] sm:$0xff]
    %vm14 = vcmask 146432
    %v15 = vsel %vm14, %v12, -inf
    %16 = vmax.xlane.f32.xlu0 %v15
    %v17 = vpop.xlane.xlu0 %16
    %v18 = vsub.f32 %v12, %v17
    %v19 = vmul.f32 %v18, 1.442695
    %v20 = vpow.pop %v19
    %v21 = vsel %vm14, %v20, 0.0
    %22 = vadd.xlane.f32.xlu0 %v21
    %v23 = vpop.xlane.xlu0 %22
    %v24 = vrcp.pop %v23
    %v25 = vmul.f32 %v23, %v24
    %v26 = vsub.f32 2.0, %v25
    %v27 = vmul.f32 %v24, %v26
    %v28 = vmul.f32 %v20, %v27
    %v29 = vlaneseq
    %v30 = vand.u32 %v29, 127
    %31 = vset.pattern.permute.xlu0 0
    %32 = vperm.xlu0 %31, %v13
    %v33 = vpop.permute.xlu0 %32
    %vm34 = vcmp.eq.s32.totalorder %v30, %v33
    %v35 = vsel %vm34, %v28, 0.0
    %v36 = vsel %vm14, %v35, 0.0
    %v37 = vrot.slane %v36, 4
    %v38 = vadd.f32 %v36, %v37
    %v39 = vrot.slane %v38, 2
    %v40 = vadd.f32 %v38, %v39
    %v41 = vrot.slane %v40, 1
    %v42 = vadd.f32 %v40, %v41
    %v43 = vsel %vm14, %v28, 0.0
    %v44 = vrot.slane %v43, 4
    %v45 = vadd.f32 %v43, %v44
    %v46 = vrot.slane %v45, 2
    %v47 = vadd.f32 %v45, %v46
    %v48 = vrot.slane %v47, 1
    %v49 = vadd.f32 %v47, %v48
    %v50 = vsel %vm34, 1.0, 0.0
    %v51 = vsel %vm14, %v50, 0.0
    %v52 = vrot.slane %v51, 4
    %v53 = vadd.f32 %v51, %v52
    %v54 = vrot.slane %v53, 2
    %v55 = vadd.f32 %v53, %v54
    %v56 = vrot.slane %v55, 1
    %v57 = vadd.f32 %v55, %v56
    %v58 = vmul.f32 %v42, 2.0
    %v59 = vadd.f32 %v49, %v57
    %v60 = vadd.f32 %v59, 1e-07
    %v61 = vrcp.pop %v60
    %v62 = vmul.f32 %v58, %v61
    %v63 = vmax.f32 %v62, 1e-07
    %v64 = vmin.f32 %v63, 0.9999999
    %vm65 = vcmask 139264
    %v66 = vsel %vm65, %v64, 0.0
    %67 = vadd.xlane.f32.xlu0 %v66
    %v68 = vpop.xlane.xlu0 %67
    %v69 = vrot.slane %v68, 4
    %v70 = vadd.f32 %v68, %v69
    %v71 = vrot.slane %v70, 2
    %v72 = vadd.f32 %v70, %v71
    %v73 = vrot.slane %v72, 1
    %v74 = vadd.f32 %v72, %v73
    %s75 = vtos %v74
    %v76 = vrcp.pop 18.0
    %s77 = vtos %v76
    %s78 = smul.f32 %s75, %s77
    %s79 = ssub.f32 1.0, %s78
    %s80 = scalar_lea.smem [#allocation2], 0
    %81 = sst [smem:[%s80]] %s79
    // Predicated region
    $region10: #{tpu_custom_call.1} parent=1 // pred_check
      _
    $region11: #{tpu_custom_call.1} parent=1 // pred_check_branch
      %83 = sbr.rel (0) target = $region13
    $region12: #{tpu_custom_call.1} parent=1 // pred_region
      %s85 = ssub.s32 16, 16
      %86 = vsyncadd [#allocation3], %s85
      %89 = dma.smem_to_hbm [#allocation2], 16, %s2, [#allocation3]
    $region13: #{tpu_custom_call.1} parent=1 // pred_fallthru
      _
    // Predicated region
    $region14: #{tpu_custom_call.1} parent=1 // pred_check
      _
    $region15: #{tpu_custom_call.1} parent=1 // pred_check_branch
      %91 = sbr.rel (0) target = $region17
    $region16: #{tpu_custom_call.1} parent=1 // pred_region
      %92 = dma.done [#allocation3], 16
    $region17: #{tpu_custom_call.1} parent=1 // pred_fallthru
      _
    %93 = sfence
    %94 = vsyncpa [#allocation3], 1

</llo_original>
